<compile_context>
chip_gen: v6e
topology: v6e:2x2x1
jax: 0.10.0
libtpu: 0.0.40
codegen_flags: <defaults>
</compile_context>

<pallas_src>
import functools

import jax
import jax.numpy as jnp
from jax.experimental import pallas as pl
from jax.experimental.pallas import tpu as pltpu


def _round_up(x: int, m: int) -> int:
    return ((x + m - 1) // m) * m


def _vmem_footprint(tm: int, tk: int, d_pad: int) -> int:
    """Bytes of VMEM used by the pipelined tiles + scratch."""
    return (2 * tm * tk * 4        # x tiles, f32, double-buffered
            + 2 * tk * d_pad * 2   # W tiles, bf16, double-buffered
            + 2 * d_pad * 4        # bias tile
            + 2 * tm * d_pad * 4   # out tiles, double-buffered
            + tm * d_pad * 4)      # f32 accumulator scratch


def _choose_tiles(B: int, K: int, D: int):
    d_pad = _round_up(D, 128)                       # lane-dense output stores

    # Batch tile: bound padding waste to <128 rows for large B; 16-multiple
    # (bf16 sublane packing) for small B.
    if B >= 128:
        tm = 256 if _round_up(B, 256) == _round_up(B, 128) else 128
    else:
        tm = _round_up(B, 16)
    b_pad = _round_up(B, tm)

    # K tile: largest candidate whose double-buffered tiles fit the budget.
    # Budget chosen to stay well under v7x's 64 MiB physical VMEM.
    budget = 40 * 1024 * 1024
    k_full = _round_up(K, 128)
    tk = 128
    for cand in (k_full, 4096, 2048, 1024, 512, 256, 128):
        if cand > k_full:
            continue
        if _vmem_footprint(tm, cand, d_pad) <= budget:
            tk = cand
            break
    k_pad = _round_up(K, tk)
    return tm, b_pad, tk, k_pad, d_pad


def prepare_weights(weight, bias, k_pad: int, d_pad: int):
    """Cast + pad the constant parameters once (hoist out of the hot path)."""
    K, D = weight.shape
    w_p = weight.astype(jnp.bfloat16)
    if (k_pad - K) or (d_pad - D):
        w_p = jnp.pad(w_p, ((0, k_pad - K), (0, d_pad - D)))
    b_p = bias.astype(jnp.float32)
    if d_pad - D:
        b_p = jnp.pad(b_p, (0, d_pad - D))
    return w_p, b_p.reshape(1, d_pad)


def _model_with_normalize_kernel(x_ref, w_ref, b_ref, o_ref, acc_ref):
    k = pl.program_id(1)

    @pl.when(k == 0)
    def _init():
        # Fold the bias add into the accumulator init ([1, D] -> [tm, D]).
        acc_ref[...] = jnp.broadcast_to(b_ref[...], acc_ref.shape).astype(jnp.float32)

    # Hot path: cast x tile to bf16 in-kernel (free VPU work, no extra HBM
    # round trip), bf16 x bf16 -> f32 accumulate on the MXU.
    acc_ref[...] += jnp.dot(
        x_ref[...].astype(jnp.bfloat16), w_ref[...],
        preferred_element_type=jnp.float32,
    )

    @pl.when(k == pl.num_programs(1) - 1)
    def _epilogue():
        feat = acc_ref[...]                                   # [tm, D] f32
        sq_sum = jnp.sum(feat * feat, axis=1, keepdims=True)  # [tm, 1]
        # rsqrt(max(s, eps^2)) == 1 / max(sqrt(s), eps)  (PyTorch eps = 1e-12)
        inv = jax.lax.rsqrt(jnp.maximum(sq_sum, 1e-24))
        o_ref[...] = (feat * inv).astype(o_ref.dtype)


@functools.partial(jax.jit, static_argnames=("tm", "tk", "d"))
def _forward(samples, w_p, b_p, *, tm, tk, d):
    B = samples.shape[0]
    x = samples.reshape(B, -1)            # [B, K] f32 (cast happens in-kernel)
    K = x.shape[1]
    k_pad, d_pad = w_p.shape
    b_pad = _round_up(B, tm)
    if (b_pad - B) or (k_pad - K):
        x = jnp.pad(x, ((0, b_pad - B), (0, k_pad - K)))

    n_i, n_k = b_pad // tm, k_pad // tk

    cost = pl.CostEstimate(
        flops=2 * b_pad * k_pad * d_pad,
        transcendentals=b_pad,  # one rsqrt per row
        bytes_accessed=(b_pad * k_pad * 4                       # x stream (f32)
                        + k_pad * d_pad * 2 * (n_i if n_k > 1 else 1)  # W stream
                        + d_pad * 4                             # bias
                        + b_pad * d_pad * 4),                   # output write
    )
    vmem_limit = max(_vmem_footprint(tm, tk, d_pad) + (4 << 20), 32 << 20)

    out = pl.pallas_call(
        _model_with_normalize_kernel,
        out_shape=jax.ShapeDtypeStruct((b_pad, d_pad), jnp.float32),
        grid_spec=pltpu.PrefetchScalarGridSpec(
            num_scalar_prefetch=0,
            grid=(n_i, n_k),
            in_specs=[
                pl.BlockSpec((tm, tk), lambda i, k: (i, k)),      # x tile (f32)
                pl.BlockSpec((tk, d_pad), lambda i, k: (k, 0)),   # W tile (bf16)
                pl.BlockSpec((1, d_pad), lambda i, k: (0, 0)),    # bias (resident)
            ],
            out_specs=pl.BlockSpec((tm, d_pad), lambda i, k: (i, 0)),
            scratch_shapes=[pltpu.VMEM((tm, d_pad), jnp.float32)],
        ),
        compiler_params=pltpu.CompilerParams(
            dimension_semantics=("parallel", "arbitrary"),
            vmem_limit_bytes=int(vmem_limit),
        ),
        cost_estimate=cost,
    )(x, w_p, b_p)

    return out[:B, :d]


def model_with_normalize(samples, weight, bias):
    """samples: [B, C, H, W] f32, weight: [K, D] f32 (K = C*H*W), bias: [D] f32."""
    B = samples.shape[0]
    K, D = weight.shape
    assert K == int(jnp.prod(jnp.array(samples.shape[1:])))
    tm, _, tk, k_pad, d_pad = _choose_tiles(B, K, D)
    # Constant-parameter prep; in real deployment hoist this out of the call.
    w_p, b_p = prepare_weights(weight, bias, k_pad, d_pad)
    return _forward(samples, w_p, b_p, tm=tm, tk=tk, d=D)


def _reference(samples, weight, bias):
    # Pure-JAX reference mirroring the PyTorch semantics; same bf16-input /
    # f32-accumulate matmul as the kernel so the comparison is apples-to-apples.
    B = samples.shape[0]
    x = samples.reshape(B, -1)
    feat = jnp.dot(
        x.astype(jnp.bfloat16),
        weight.astype(jnp.bfloat16),
        preferred_element_type=jnp.float32,
    ) + bias.astype(jnp.float32)
    norm = jnp.sqrt(jnp.sum(feat * feat, axis=1, keepdims=True))
    return feat / jnp.maximum(norm, 1e-12)


if __name__ == "__main__":
    key = jax.random.PRNGKey(0)
    k_x, k_w, k_b = jax.random.split(key, 3)

    B, C, H, W = 2, 4, 16, 16          # NCHW input, K = 1024
    D = 128                            # embedding dim of the synthetic model
    K = C * H * W

    samples = jax.random.normal(k_x, (B, C, H, W), dtype=jnp.float32)
    weight = jax.random.normal(k_w, (K, D), dtype=jnp.float32) * 0.02
    bias = jax.random.normal(k_b, (D,), dtype=jnp.float32) * 0.01

    out = jax.block_until_ready(model_with_normalize(samples, weight, bias))
    ref = _reference(samples, weight, bias)

    assert out.shape == (B, D)
    # Tolerance reflects bf16-streamed matmul with f32 accumulation.
    assert jnp.allclose(out, ref, atol=1e-4, rtol=1e-4)
    # Rows should be unit-norm (normalization done in f32 on the kernel's feat).
    assert jnp.allclose(jnp.linalg.norm(out, axis=1), 1.0, atol=1e-5)

    print("KERNEL_OK")
</pallas_src>

<mosaic_0001>
module attributes {stable_mosaic.version = 11 : i64} {
  func.func @_model_with_normalize_kernel(%arg0: i32, %arg1: i32, %arg2: memref<16x1024xf32, #tpu.memory_space<vmem>>, %arg3: memref<1024x128xbf16, #tpu.memory_space<vmem>>, %arg4: memref<1x128xf32, #tpu.memory_space<vmem>>, %arg5: memref<16x128xf32, #tpu.memory_space<vmem>>, %arg6: memref<16x128xf32, #tpu.memory_space<vmem>>) attributes {dimension_semantics = [#tpu.dimension_semantics<parallel>, #tpu.dimension_semantics<arbitrary>], iteration_bounds = array<i64: 1, 1>, scalar_prefetch = 0 : i64, scratch_operands = 1 : i64, tpu.core_type = #tpu.core_type<tc>, window_params = [{transform_indices = @transform_0, window_bounds = array<i64: 16, 1024>}, {transform_indices = @transform_1, window_bounds = array<i64: 1024, 128>}, {pipeline_mode = #tpu.pipeline_mode<synchronous>, transform_indices = @transform_2, window_bounds = array<i64: 1, 128>}, {transform_indices = @transform_3, window_bounds = array<i64: 16, 128>}]} {
    %c0_i32 = arith.constant 0 : i32
    %0 = arith.cmpi eq, %arg1, %c0_i32 : i32
    %1 = arith.extui %0 : i1 to i32
    %c0_i32_0 = arith.constant 0 : i32
    %2 = arith.cmpi ne, %1, %c0_i32_0 : i32
    scf.if %2 {
      %c0_10 = arith.constant 0 : index
      %c0_11 = arith.constant 0 : index
      %13 = vector.load %arg4[%c0_10, %c0_11] : memref<1x128xf32, #tpu.memory_space<vmem>>, vector<1x128xf32>
      %14 = vector.shape_cast %13 : vector<1x128xf32> to vector<1x128xf32>
      %15 = vector.broadcast %14 : vector<1x128xf32> to vector<16x128xf32>
      %c0_12 = arith.constant 0 : index
      %c0_13 = arith.constant 0 : index
      %16 = vector.load %arg6[%c0_12, %c0_13] : memref<16x128xf32, #tpu.memory_space<vmem>>, vector<16x128xf32>
      tpu.vector_store %arg6[%c0_12, %c0_13], %15 {strides = array<i32>} : memref<16x128xf32, #tpu.memory_space<vmem>>, vector<16x128xf32>,
    } else {
    }
    %c0 = arith.constant 0 : index
    %c0_1 = arith.constant 0 : index
    %3 = vector.load %arg6[%c0, %c0_1] : memref<16x128xf32, #tpu.memory_space<vmem>>, vector<16x128xf32>
    %c0_2 = arith.constant 0 : index
    %c0_3 = arith.constant 0 : index
    %4 = vector.load %arg2[%c0_2, %c0_3] : memref<16x1024xf32, #tpu.memory_space<vmem>>, vector<16x1024xf32>
    %5 = arith.truncf %4 : vector<16x1024xf32> to vector<16x1024xbf16>
    %c0_4 = arith.constant 0 : index
    %c0_5 = arith.constant 0 : index
    %6 = vector.load %arg3[%c0_4, %c0_5] : memref<1024x128xbf16, #tpu.memory_space<vmem>>, vector<1024x128xbf16>
    %cst = arith.constant dense<0.000000e+00> : vector<16x128xf32>
    %7 = tpu.matmul %5, %6, %cst {dimension_numbers = #tpu.dot_dimension_numbers<[1], [0], [0], [1], [0, 0, 1, 1], [], []>} : vector<16x1024xbf16>, vector<1024x128xbf16>, vector<16x128xf32> -> vector<16x128xf32>
    %8 = arith.addf %3, %7 : vector<16x128xf32>
    %c0_6 = arith.constant 0 : index
    %c0_7 = arith.constant 0 : index
    %9 = vector.load %arg6[%c0_6, %c0_7] : memref<16x128xf32, #tpu.memory_space<vmem>>, vector<16x128xf32>
    tpu.vector_store %arg6[%c0_6, %c0_7], %8 {strides = array<i32>} : memref<16x128xf32, #tpu.memory_space<vmem>>, vector<16x128xf32>,
    %c0_i32_8 = arith.constant 0 : i32
    %10 = arith.cmpi eq, %arg1, %c0_i32_8 : i32
    %11 = arith.extui %10 : i1 to i32
    %c0_i32_9 = arith.constant 0 : i32
    %12 = arith.cmpi ne, %11, %c0_i32_9 : i32
    scf.if %12 {
      %c0_10 = arith.constant 0 : index
      %c0_11 = arith.constant 0 : index
      %13 = vector.load %arg6[%c0_10, %c0_11] : memref<16x128xf32, #tpu.memory_space<vmem>>, vector<16x128xf32>
      %14 = arith.mulf %13, %13 : vector<16x128xf32>
      %cst_12 = arith.constant dense<0.000000e+00> : vector<16xf32>
      %15 = vector.multi_reduction <add>, %14, %cst_12 [1] : vector<16x128xf32> to vector<16xf32>
      %16 = vector.shape_cast %15 : vector<16xf32> to vector<16x1xf32>
      %cst_13 = arith.constant 1.000000e-24 : f32
      %17 = vector.broadcast %cst_13 : f32 to vector<16x1xf32>
      %18 = arith.maximumf %16, %17 : vector<16x1xf32>
      %19 = math.rsqrt %18 : vector<16x1xf32>
      %20 = vector.broadcast %19 : vector<16x1xf32> to vector<16x128xf32>
      %21 = arith.mulf %13, %20 : vector<16x128xf32>
      %c0_14 = arith.constant 0 : index
      %c0_15 = arith.constant 0 : index
      %22 = vector.load %arg5[%c0_14, %c0_15] : memref<16x128xf32, #tpu.memory_space<vmem>>, vector<16x128xf32>
      tpu.vector_store %arg5[%c0_14, %c0_15], %21 {strides = array<i32>} : memref<16x128xf32, #tpu.memory_space<vmem>>, vector<16x128xf32>,
    } else {
    }
    return
  }
  func.func @transform_0(%arg0: i32, %arg1: i32) -> (i32, i32) {
    %c0_i32 = arith.constant 0 : i32
    return %arg0, %arg1 : i32, i32
  }
  func.func @transform_1(%arg0: i32, %arg1: i32) -> (i32, i32) {
    %c0_i32 = arith.constant 0 : i32
    %c0_i32_0 = arith.constant 0 : i32
    return %arg1, %c0_i32 : i32, i32
  }
  func.func @transform_2(%arg0: i32, %arg1: i32) -> (i32, i32) {
    %c0_i32 = arith.constant 0 : i32
    %c0_i32_0 = arith.constant 0 : i32
    %c0_i32_1 = arith.constant 0 : i32
    return %c0_i32, %c0_i32_0 : i32, i32
  }
  func.func @transform_3(%arg0: i32, %arg1: i32) -> (i32, i32) {
    %c0_i32 = arith.constant 0 : i32
    %c0_i32_0 = arith.constant 0 : i32
    return %arg0, %c0_i32 : i32, i32
  }
}

</mosaic_0001>

<llo_original>
// kernel: _forward.1
$region0: #{_forward.1}
  #allocation0 [shape = 'u32[]', space=smem, size = 0x4, offset = 0x4, fixed_abs, tag = 'smem constant byte address 0x4 - core index']
  #allocation1 [shape = 'u32[144,128]{1,0:T(1,128)}', space=vmem, size = 0x12000, scoped, tag = 'internal scratch']
  #allocation2 [shape = 'f32[16,128]{1,0:T(8,128)}', space=vmem, size = 0x2000, scoped, tag = 'scratch operand']
  %s0 = inlined_call_operand.vmem [shape: f32[16,1024], index: 0, kind: input, shape index: {}]
  %s1 = inlined_call_operand.hbm [shape: bf16[1024,128], index: 1, kind: input, shape index: {}]
  %s2 = inlined_call_operand.vmem [shape: f32[1,128], index: 2, kind: input, shape index: {}]
  %s3 = inlined_call_operand.vmem [shape: f32[16,128], index: 3, kind: output, shape index: {}]
  %s4 = sld [smem:[#allocation0]]
  $region34: #{_forward.1} parent=0
    _
  %s6 = ssub.s32 1, %s4
  %s7 = scalar_select 0, %s6, %s4
  $region1: #{_forward.1} parent=0
    #allocation3 [shape = 'u8[262144]{0}', space=vmem, size = 0x40000, scoped, tag = 'input window, operand 1, single buffered']
    #allocation4 [shape = 's32[1]{0}', space=sflag, size = 0x4, scoped, tag = 'scoped memory for _forward.1']
    %8 = vsyncpa [#allocation4], 0
    // Predicated region
    $region2: #{_forward.1} parent=1 // pred_check
      _
    $region3: #{_forward.1} parent=1 // pred_check_branch
      %10 = sbr.rel (0) target = $region5
    $region4: #{_forward.1} parent=1 // pred_region
      _
    $region5: #{_forward.1} parent=1 // pred_fallthru
      _
    // Predicated region
    $region6: #{_forward.1} parent=1 // pred_check
      _
    $region7: #{_forward.1} parent=1 // pred_check_branch
      %12 = sbr.rel (0) target = $region9
    $region8: #{_forward.1} parent=1 // pred_region
      %s14 = ssub.s32 8192, 8192
      %15 = vsyncadd [#allocation4], %s14
      %s16 = sshll.u32 [#allocation3], 4
      %s17 = int_to_ptr.vmem [resolvable:$true] %s16
      %22 = dma.hbm_to_vmem [thread:$0]  %s1, 8192, %s17, [#allocation4], 64, 64, 4
    $region9: #{_forward.1} parent=1 // pred_fallthru
      _
    // Predicated region
    $region10: #{_forward.1} parent=1 // pred_check
      _
    $region11: #{_forward.1} parent=1 // pred_check_branch
      %24 = sbr.rel (0) target = $region13
    $region12: #{_forward.1} parent=1 // pred_region
      _
    $region13: #{_forward.1} parent=1 // pred_fallthru
      _
    // Predicated region
    $region14: #{_forward.1} parent=1 // pred_check
      _
    $region15: #{_forward.1} parent=1 // pred_check_branch
      %26 = sbr.rel (0) target = $region17
    $region16: #{_forward.1} parent=1 // pred_region
      %27 = dma.done [#allocation4], 8192
    $region17: #{_forward.1} parent=1 // pred_fallthru
      _
    %p29 = scmp.eq.s32.totalorder 0, 0
    // Predicated region
    $region18: #{_forward.1} parent=1 // pred_check
      %p30 = pneg %p29
    $region19: #{_forward.1} parent=1 // pred_check_branch
      %32 = sbr.rel (%p30) target = $region21
    $region20: #{_forward.1} parent=1 // pred_region
      %v33 = vld [vmem:[%s2] sm:$0x1]
      %v35 = vlaneseq
      %v36 = vshrl.u32 %v35, 7
      %v37 = vsub.s32 0, %v36
      %v38 = vrot.slane %v33, %v37
      %40 = vst [vmem:[#allocation2] sm:$0xff] %v38
      %41 = vst [vmem:[#allocation2 + $0x8] sm:$0xff] %v38
    $region21: #{_forward.1} parent=1 // pred_fallthru
      _
    %v42 = vld [vmem:[#allocation2] sm:$0xff]
    %v43 = vld [vmem:[#allocation2 + $0x8] sm:$0xff]
    %v44 = vld [vmem:[%s0] sm:$0xff]
    %v45 = vld [vmem:[%s0 + $0x8] sm:$0xff]
    %v46 = vld [vmem:[%s0 + $0x10] sm:$0xff]
    %v47 = vld [vmem:[%s0 + $0x18] sm:$0xff]
    %v48 = vld [vmem:[%s0 + $0x20] sm:$0xff]
    %v49 = vld [vmem:[%s0 + $0x28] sm:$0xff]
    %v50 = vld [vmem:[%s0 + $0x30] sm:$0xff]
    %v51 = vld [vmem:[%s0 + $0x38] sm:$0xff]
    %v52 = vld [vmem:[%s0 + $0x40] sm:$0xff]
    %v53 = vld [vmem:[%s0 + $0x48] sm:$0xff]
    %v54 = vld [vmem:[%s0 + $0x50] sm:$0xff]
    %v55 = vld [vmem:[%s0 + $0x58] sm:$0xff]
    %v56 = vld [vmem:[%s0 + $0x60] sm:$0xff]
    %v57 = vld [vmem:[%s0 + $0x68] sm:$0xff]
    %v58 = vld [vmem:[%s0 + $0x70] sm:$0xff]
    %v59 = vld [vmem:[%s0 + $0x78] sm:$0xff]
    %v60 = vpack.c.bf16 %v52, %v44
    %v61 = vpack.c.bf16 %v53, %v45
    %v62 = vpack.c.bf16 %v54, %v46
    %v63 = vpack.c.bf16 %v55, %v47
    %v64 = vpack.c.bf16 %v56, %v48
    %v65 = vpack.c.bf16 %v57, %v49
    %v66 = vpack.c.bf16 %v58, %v50
    %v67 = vpack.c.bf16 %v59, %v51
    %v68 = vld [vmem:[#allocation3] sm:$0xf]
    %v69 = vld [vmem:[#allocation3 + $0x4] sm:$0xf]
    %v70 = vld [vmem:[#allocation3 + $0x8] sm:$0xf]
    %v71 = vld [vmem:[#allocation3 + $0xc] sm:$0xf]
    %v72 = vld [vmem:[#allocation3 + $0x10] sm:$0xf]
    %v73 = vld [vmem:[#allocation3 + $0x14] sm:$0xf]
    %v74 = vld [vmem:[#allocation3 + $0x18] sm:$0xf]
    %v75 = vld [vmem:[#allocation3 + $0x1c] sm:$0xf]
    %v76 = vld [vmem:[#allocation3 + $0x20] sm:$0xf]
    %v77 = vld [vmem:[#allocation3 + $0x24] sm:$0xf]
    %v78 = vld [vmem:[#allocation3 + $0x28] sm:$0xf]
    %v79 = vld [vmem:[#allocation3 + $0x2c] sm:$0xf]
    %v80 = vld [vmem:[#allocation3 + $0x30] sm:$0xf]
    %v81 = vld [vmem:[#allocation3 + $0x34] sm:$0xf]
    %v82 = vld [vmem:[#allocation3 + $0x38] sm:$0xf]
    %v83 = vld [vmem:[#allocation3 + $0x3c] sm:$0xf]
    %v84 = vld [vmem:[#allocation3 + $0x40] sm:$0xf]
    %v85 = vld [vmem:[#allocation3 + $0x44] sm:$0xf]
    %v86 = vld [vmem:[#allocation3 + $0x48] sm:$0xf]
    %v87 = vld [vmem:[#allocation3 + $0x4c] sm:$0xf]
    %v88 = vld [vmem:[#allocation3 + $0x50] sm:$0xf]
    %v89 = vld [vmem:[#allocation3 + $0x54] sm:$0xf]
    %v90 = vld [vmem:[#allocation3 + $0x58] sm:$0xf]
    %v91 = vld [vmem:[#allocation3 + $0x5c] sm:$0xf]
    %v92 = vld [vmem:[#allocation3 + $0x60] sm:$0xf]
    %v93 = vld [vmem:[#allocation3 + $0x64] sm:$0xf]
    %v94 = vld [vmem:[#allocation3 + $0x68] sm:$0xf]
    %v95 = vld [vmem:[#allocation3 + $0x6c] sm:$0xf]
    %v96 = vld [vmem:[#allocation3 + $0x70] sm:$0xf]
    %v97 = vld [vmem:[#allocation3 + $0x74] sm:$0xf]
    %v98 = vld [vmem:[#allocation3 + $0x78] sm:$0xf]
    %v99 = vld [vmem:[#allocation3 + $0x7c] sm:$0xf]
    %v100 = vld [vmem:[#allocation3 + $0x80] sm:$0xf]
    %v101 = vld [vmem:[#allocation3 + $0x84] sm:$0xf]
    %v102 = vld [vmem:[#allocation3 + $0x88] sm:$0xf]
    %v103 = vld [vmem:[#allocation3 + $0x8c] sm:$0xf]
    %v104 = vld [vmem:[#allocation3 + $0x90] sm:$0xf]
    %v105 = vld [vmem:[#allocation3 + $0x94] sm:$0xf]
    %v106 = vld [vmem:[#allocation3 + $0x98] sm:$0xf]
    %v107 = vld [vmem:[#allocation3 + $0x9c] sm:$0xf]
    %v108 = vld [vmem:[#allocation3 + $0xa0] sm:$0xf]
    %v109 = vld [vmem:[#allocation3 + $0xa4] sm:$0xf]
    %v110 = vld [vmem:[#allocation3 + $0xa8] sm:$0xf]
    %v111 = vld [vmem:[#allocation3 + $0xac] sm:$0xf]
    %v112 = vld [vmem:[#allocation3 + $0xb0] sm:$0xf]
    %v113 = vld [vmem:[#allocation3 + $0xb4] sm:$0xf]
    %v114 = vld [vmem:[#allocation3 + $0xb8] sm:$0xf]
    %v115 = vld [vmem:[#allocation3 + $0xbc] sm:$0xf]
    %v116 = vld [vmem:[#allocation3 + $0xc0] sm:$0xf]
    %v117 = vld [vmem:[#allocation3 + $0xc4] sm:$0xf]
    %v118 = vld [vmem:[#allocation3 + $0xc8] sm:$0xf]
    %v119 = vld [vmem:[#allocation3 + $0xcc] sm:$0xf]
    %v120 = vld [vmem:[#allocation3 + $0xd0] sm:$0xf]
    %v121 = vld [vmem:[#allocation3 + $0xd4] sm:$0xf]
    %v122 = vld [vmem:[#allocation3 + $0xd8] sm:$0xf]
    %v123 = vld [vmem:[#allocation3 + $0xdc] sm:$0xf]
    %v124 = vld [vmem:[#allocation3 + $0xe0] sm:$0xf]
    %v125 = vld [vmem:[#allocation3 + $0xe4] sm:$0xf]
    %v126 = vld [vmem:[#allocation3 + $0xe8] sm:$0xf]
    %v127 = vld [vmem:[#allocation3 + $0xec] sm:$0xf]
    %v128 = vld [vmem:[#allocation3 + $0xf0] sm:$0xf]
    %v129 = vld [vmem:[#allocation3 + $0xf4] sm:$0xf]
    %v130 = vld [vmem:[#allocation3 + $0xf8] sm:$0xf]
    %v131 = vld [vmem:[#allocation3 + $0xfc] sm:$0xf]
    %v132 = vld [vmem:[#allocation3 + $0x100] sm:$0xf]
    %v133 = vld [vmem:[#allocation3 + $0x104] sm:$0xf]
    %v134 = vld [vmem:[#allocation3 + $0x108] sm:$0xf]
    %v135 = vld [vmem:[#allocation3 + $0x10c] sm:$0xf]
    %v136 = vld [vmem:[#allocation3 + $0x110] sm:$0xf]
    %v137 = vld [vmem:[#allocation3 + $0x114] sm:$0xf]
    %v138 = vld [vmem:[#allocation3 + $0x118] sm:$0xf]
    %v139 = vld [vmem:[#allocation3 + $0x11c] sm:$0xf]
    %v140 = vld [vmem:[#allocation3 + $0x120] sm:$0xf]
    %v141 = vld [vmem:[#allocation3 + $0x124] sm:$0xf]
    %v142 = vld [vmem:[#allocation3 + $0x128] sm:$0xf]
    %v143 = vld [vmem:[#allocation3 + $0x12c] sm:$0xf]
    %v144 = vld [vmem:[#allocation3 + $0x130] sm:$0xf]
    %v145 = vld [vmem:[#allocation3 + $0x134] sm:$0xf]
    %v146 = vld [vmem:[#allocation3 + $0x138] sm:$0xf]
    %v147 = vld [vmem:[#allocation3 + $0x13c] sm:$0xf]
    %v148 = vld [vmem:[#allocation3 + $0x140] sm:$0xf]
    %v149 = vld [vmem:[#allocation3 + $0x144] sm:$0xf]
    %v150 = vld [vmem:[#allocation3 + $0x148] sm:$0xf]
    %v151 = vld [vmem:[#allocation3 + $0x14c] sm:$0xf]
    %v152 = vld [vmem:[#allocation3 + $0x150] sm:$0xf]
    %v153 = vld [vmem:[#allocation3 + $0x154] sm:$0xf]
    %v154 = vld [vmem:[#allocation3 + $0x158] sm:$0xf]
    %v155 = vld [vmem:[#allocation3 + $0x15c] sm:$0xf]
    %v156 = vld [vmem:[#allocation3 + $0x160] sm:$0xf]
    %v157 = vld [vmem:[#allocation3 + $0x164] sm:$0xf]
    %v158 = vld [vmem:[#allocation3 + $0x168] sm:$0xf]
    %v159 = vld [vmem:[#allocation3 + $0x16c] sm:$0xf]
    %v160 = vld [vmem:[#allocation3 + $0x170] sm:$0xf]
    %v161 = vld [vmem:[#allocation3 + $0x174] sm:$0xf]
    %v162 = vld [vmem:[#allocation3 + $0x178] sm:$0xf]
    %v163 = vld [vmem:[#allocation3 + $0x17c] sm:$0xf]
    %v164 = vld [vmem:[#allocation3 + $0x180] sm:$0xf]
    %v165 = vld [vmem:[#allocation3 + $0x184] sm:$0xf]
    %v166 = vld [vmem:[#allocation3 + $0x188] sm:$0xf]
    %v167 = vld [vmem:[#allocation3 + $0x18c] sm:$0xf]
    %v168 = vld [vmem:[#allocation3 + $0x190] sm:$0xf]
    %v169 = vld [vmem:[#allocation3 + $0x194] sm:$0xf]
    %v170 = vld [vmem:[#allocation3 + $0x198] sm:$0xf]
    %v171 = vld [vmem:[#allocation3 + $0x19c] sm:$0xf]
    %v172 = vld [vmem:[#allocation3 + $0x1a0] sm:$0xf]
    %v173 = vld [vmem:[#allocation3 + $0x1a4] sm:$0xf]
    %v174 = vld [vmem:[#allocation3 + $0x1a8] sm:$0xf]
    %v175 = vld [vmem:[#allocation3 + $0x1ac] sm:$0xf]
    %v176 = vld [vmem:[#allocation3 + $0x1b0] sm:$0xf]
    %v177 = vld [vmem:[#allocation3 + $0x1b4] sm:$0xf]
    %v178 = vld [vmem:[#allocation3 + $0x1b8] sm:$0xf]
    %v179 = vld [vmem:[#allocation3 + $0x1bc] sm:$0xf]
    %v180 = vld [vmem:[#allocation3 + $0x1c0] sm:$0xf]
    %v181 = vld [vmem:[#allocation3 + $0x1c4] sm:$0xf]
    %v182 = vld [vmem:[#allocation3 + $0x1c8] sm:$0xf]
    %v183 = vld [vmem:[#allocation3 + $0x1cc] sm:$0xf]
    %v184 = vld [vmem:[#allocation3 + $0x1d0] sm:$0xf]
    %v185 = vld [vmem:[#allocation3 + $0x1d4] sm:$0xf]
    %v186 = vld [vmem:[#allocation3 + $0x1d8] sm:$0xf]
    %v187 = vld [vmem:[#allocation3 + $0x1dc] sm:$0xf]
    %v188 = vld [vmem:[#allocation3 + $0x1e0] sm:$0xf]
    %v189 = vld [vmem:[#allocation3 + $0x1e4] sm:$0xf]
    %v190 = vld [vmem:[#allocation3 + $0x1e8] sm:$0xf]
    %v191 = vld [vmem:[#allocation3 + $0x1ec] sm:$0xf]
    %v192 = vld [vmem:[#allocation3 + $0x1f0] sm:$0xf]
    %v193 = vld [vmem:[#allocation3 + $0x1f4] sm:$0xf]
    %v194 = vld [vmem:[#allocation3 + $0x1f8] sm:$0xf]
    %v195 = vld [vmem:[#allocation3 + $0x1fc] sm:$0xf]
    %v324 = vunpack.c.l.b16 %v68
    %v325 = vunpack.c.l.b16 %v69
    %v326 = vunpack.c.l.b16 %v70
    %v327 = vunpack.c.l.b16 %v71
    %v328 = vunpack.c.l.b16 %v72
    %v329 = vunpack.c.l.b16 %v73
    %v330 = vunpack.c.l.b16 %v74
    %v331 = vunpack.c.l.b16 %v75
    %v332 = vunpack.c.l.b16 %v76
    %v333 = vunpack.c.l.b16 %v77
    %v334 = vunpack.c.l.b16 %v78
    %v335 = vunpack.c.l.b16 %v79
    %v336 = vunpack.c.l.b16 %v80
    %v337 = vunpack.c.l.b16 %v81
    %v338 = vunpack.c.l.b16 %v82
    %v339 = vunpack.c.l.b16 %v83
    %v340 = vunpack.c.l.b16 %v84
    %v341 = vunpack.c.l.b16 %v85
    %v342 = vunpack.c.l.b16 %v86
    %v343 = vunpack.c.l.b16 %v87
    %v344 = vunpack.c.l.b16 %v88
    %v345 = vunpack.c.l.b16 %v89
    %v346 = vunpack.c.l.b16 %v90
    %v347 = vunpack.c.l.b16 %v91
    %v348 = vunpack.c.l.b16 %v92
    %v349 = vunpack.c.l.b16 %v93
    %v350 = vunpack.c.l.b16 %v94
    %v351 = vunpack.c.l.b16 %v95
    %v352 = vunpack.c.l.b16 %v96
    %v353 = vunpack.c.l.b16 %v97
    %v354 = vunpack.c.l.b16 %v98
    %v355 = vunpack.c.l.b16 %v99
    %v356 = vunpack.c.l.b16 %v100
    %v357 = vunpack.c.l.b16 %v101
    %v358 = vunpack.c.l.b16 %v102
    %v359 = vunpack.c.l.b16 %v103
    %v360 = vunpack.c.l.b16 %v104
    %v361 = vunpack.c.l.b16 %v105
    %v362 = vunpack.c.l.b16 %v106
    %v363 = vunpack.c.l.b16 %v107
    %v364 = vunpack.c.l.b16 %v108
    %v365 = vunpack.c.l.b16 %v109
    %v366 = vunpack.c.l.b16 %v110
    %v367 = vunpack.c.l.b16 %v111
    %v368 = vunpack.c.l.b16 %v112
    %v369 = vunpack.c.l.b16 %v113
    %v370 = vunpack.c.l.b16 %v114
    %v371 = vunpack.c.l.b16 %v115
    %v372 = vunpack.c.l.b16 %v116
    %v373 = vunpack.c.l.b16 %v117
    %v374 = vunpack.c.l.b16 %v118
    %v375 = vunpack.c.l.b16 %v119
    %v376 = vunpack.c.l.b16 %v120
    %v377 = vunpack.c.l.b16 %v121
    %v378 = vunpack.c.l.b16 %v122
    %v379 = vunpack.c.l.b16 %v123
    %v380 = vunpack.c.l.b16 %v124
    %v381 = vunpack.c.l.b16 %v125
    %v382 = vunpack.c.l.b16 %v126
    %v383 = vunpack.c.l.b16 %v127
    %v384 = vunpack.c.l.b16 %v128
    %v385 = vunpack.c.l.b16 %v129
    %v386 = vunpack.c.l.b16 %v130
    %v387 = vunpack.c.l.b16 %v131
    %v388 = vunpack.c.l.b16 %v132
    %v389 = vunpack.c.l.b16 %v133
    %v390 = vunpack.c.l.b16 %v134
    %v391 = vunpack.c.l.b16 %v135
    %v392 = vunpack.c.l.b16 %v136
    %v393 = vunpack.c.l.b16 %v137
    %v394 = vunpack.c.l.b16 %v138
    %v395 = vunpack.c.l.b16 %v139
    %v396 = vunpack.c.l.b16 %v140
    %v397 = vunpack.c.l.b16 %v141
    %v398 = vunpack.c.l.b16 %v142
    %v399 = vunpack.c.l.b16 %v143
    %v400 = vunpack.c.l.b16 %v144
    %v401 = vunpack.c.l.b16 %v145
    %v402 = vunpack.c.l.b16 %v146
    %v403 = vunpack.c.l.b16 %v147
    %v404 = vunpack.c.l.b16 %v148
    %v405 = vunpack.c.l.b16 %v149
    %v406 = vunpack.c.l.b16 %v150
    %v407 = vunpack.c.l.b16 %v151
    %v408 = vunpack.c.l.b16 %v152
    %v409 = vunpack.c.l.b16 %v153
    %v410 = vunpack.c.l.b16 %v154
    %v411 = vunpack.c.l.b16 %v155
    %v412 = vunpack.c.l.b16 %v156
    %v413 = vunpack.c.l.b16 %v157
    %v414 = vunpack.c.l.b16 %v158
    %v415 = vunpack.c.l.b16 %v159
    %v416 = vunpack.c.l.b16 %v160
    %v417 = vunpack.c.l.b16 %v161
    %v418 = vunpack.c.l.b16 %v162
    %v419 = vunpack.c.l.b16 %v163
    %v420 = vunpack.c.l.b16 %v164
    %v421 = vunpack.c.l.b16 %v165
    %v422 = vunpack.c.l.b16 %v166
    %v423 = vunpack.c.l.b16 %v167
    %v424 = vunpack.c.l.b16 %v168
    %v425 = vunpack.c.l.b16 %v169
    %v426 = vunpack.c.l.b16 %v170
    %v427 = vunpack.c.l.b16 %v171
    %v428 = vunpack.c.l.b16 %v172
    %v429 = vunpack.c.l.b16 %v173
    %v430 = vunpack.c.l.b16 %v174
    %v431 = vunpack.c.l.b16 %v175
    %v432 = vunpack.c.l.b16 %v176
    %v433 = vunpack.c.l.b16 %v177
    %v434 = vunpack.c.l.b16 %v178
    %v435 = vunpack.c.l.b16 %v179
    %v436 = vunpack.c.l.b16 %v180
    %v437 = vunpack.c.l.b16 %v181
    %v438 = vunpack.c.l.b16 %v182
    %v439 = vunpack.c.l.b16 %v183
    %v440 = vunpack.c.l.b16 %v184
    %v441 = vunpack.c.l.b16 %v185
    %v442 = vunpack.c.l.b16 %v186
    %v443 = vunpack.c.l.b16 %v187
    %v444 = vunpack.c.l.b16 %v188
    %v445 = vunpack.c.l.b16 %v189
    %v446 = vunpack.c.l.b16 %v190
    %v447 = vunpack.c.l.b16 %v191
    %v448 = vunpack.c.l.b16 %v192
    %v449 = vunpack.c.l.b16 %v193
    %v450 = vunpack.c.l.b16 %v194
    %v451 = vunpack.c.l.b16 %v195
    %v452 = vpack.c.b16 %v325, %v324
    %v453 = vpack.c.b16 %v327, %v326
    %v454 = vpack.c.b16 %v329, %v328
    %v455 = vpack.c.b16 %v331, %v330
    %v456 = vpack.c.b16 %v333, %v332
    %v457 = vpack.c.b16 %v335, %v334
    %v458 = vpack.c.b16 %v337, %v336
    %v459 = vpack.c.b16 %v339, %v338
    %v460 = vpack.c.b16 %v341, %v340
    %v461 = vpack.c.b16 %v343, %v342
    %v462 = vpack.c.b16 %v345, %v344
    %v463 = vpack.c.b16 %v347, %v346
    %v464 = vpack.c.b16 %v349, %v348
    %v465 = vpack.c.b16 %v351, %v350
    %v466 = vpack.c.b16 %v353, %v352
    %v467 = vpack.c.b16 %v355, %v354
    %v468 = vpack.c.b16 %v357, %v356
    %v469 = vpack.c.b16 %v359, %v358
    %v470 = vpack.c.b16 %v361, %v360
    %v471 = vpack.c.b16 %v363, %v362
    %v472 = vpack.c.b16 %v365, %v364
    %v473 = vpack.c.b16 %v367, %v366
    %v474 = vpack.c.b16 %v369, %v368
    %v475 = vpack.c.b16 %v371, %v370
    %v476 = vpack.c.b16 %v373, %v372
    %v477 = vpack.c.b16 %v375, %v374
    %v478 = vpack.c.b16 %v377, %v376
    %v479 = vpack.c.b16 %v379, %v378
    %v480 = vpack.c.b16 %v381, %v380
    %v481 = vpack.c.b16 %v383, %v382
    %v482 = vpack.c.b16 %v385, %v384
    %v483 = vpack.c.b16 %v387, %v386
    %v484 = vpack.c.b16 %v389, %v388
    %v485 = vpack.c.b16 %v391, %v390
    %v486 = vpack.c.b16 %v393, %v392
    %v487 = vpack.c.b16 %v395, %v394
    %v488 = vpack.c.b16 %v397, %v396
    %v489 = vpack.c.b16 %v399, %v398
    %v490 = vpack.c.b16 %v401, %v400
    %v491 = vpack.c.b16 %v403, %v402
    %v492 = vpack.c.b16 %v405, %v404
    %v493 = vpack.c.b16 %v407, %v406
    %v494 = vpack.c.b16 %v409, %v408
    %v495 = vpack.c.b16 %v411, %v410
    %v496 = vpack.c.b16 %v413, %v412
    %v497 = vpack.c.b16 %v415, %v414
    %v498 = vpack.c.b16 %v417, %v416
    %v499 = vpack.c.b16 %v419, %v418
    %v500 = vpack.c.b16 %v421, %v420
    %v501 = vpack.c.b16 %v423, %v422
    %v502 = vpack.c.b16 %v425, %v424
    %v503 = vpack.c.b16 %v427, %v426
    %v504 = vpack.c.b16 %v429, %v428
    %v505 = vpack.c.b16 %v431, %v430
    %v506 = vpack.c.b16 %v433, %v432
    %v507 = vpack.c.b16 %v435, %v434
    %v508 = vpack.c.b16 %v437, %v436
    %v509 = vpack.c.b16 %v439, %v438
    %v510 = vpack.c.b16 %v441, %v440
    %v511 = vpack.c.b16 %v443, %v442
    %v512 = vpack.c.b16 %v445, %v444
    %v513 = vpack.c.b16 %v447, %v446
    %v514 = vpack.c.b16 %v449, %v448
    %v515 = vpack.c.b16 %v451, %v450
    %580 = vmatprep.subr.bf16.mxu0 0
    %581 = vmatpush1.bf16.msra.mxu0 %v459
    %582 = vmatprep.subr.bf16.mxu0 0
    %583 = vmatpush1.bf16.msra.mxu0 %v458
    %584 = vmatprep.subr.bf16.mxu0 0
    %585 = vmatpush1.bf16.msra.mxu0 %v457
    %586 = vmatprep.subr.bf16.mxu0 0
    %587 = vmatpush1.bf16.msra.mxu0 %v456
    %588 = vmatprep.subr.bf16.mxu0 0
    %589 = vmatpush1.bf16.msra.mxu0 %v455
    %590 = vmatprep.subr.bf16.mxu0 0
    %591 = vmatpush1.bf16.msra.mxu0 %v454
    %592 = vmatprep.subr.bf16.mxu0 0
    %593 = vmatpush1.bf16.msra.mxu0 %v453
    %594 = vmatprep.subr.bf16.mxu0 0
    %595 = vmatpush1.bf16.msra.mxu0 %v452
    %596 = vmatprep.subr.bf16.mxu0 0
    %597 = vmatpush2.bf16.msra.mxu0 %v467
    %598 = vmatprep.subr.bf16.mxu0 0
    %599 = vmatpush2.bf16.msra.mxu0 %v466
    %600 = vmatprep.subr.bf16.mxu0 0
    %601 = vmatpush2.bf16.msra.mxu0 %v465
    %602 = vmatprep.subr.bf16.mxu0 0
    %603 = vmatpush2.bf16.msra.mxu0 %v464
    %604 = vmatprep.subr.bf16.mxu0 0
    %605 = vmatpush2.bf16.msra.mxu0 %v463
    %606 = vmatprep.subr.bf16.mxu0 0
    %607 = vmatpush2.bf16.msra.mxu0 %v462
    %608 = vmatprep.subr.bf16.mxu0 0
    %609 = vmatpush2.bf16.msra.mxu0 %v461
    %610 = vmatprep.subr.bf16.mxu0 0
    %611 = vmatpush2.bf16.msra.mxu0 %v460
    %612 = vmatprep.mubr.bf16.mxu0 %v61
    %613 = vmatmul.mubr.bf16.gmra.mxu0 %v60
    %v614 = vpop.f32.mrf.mxu0
    %v615 = vadd.f32 0.0, %v614
    %v616 = vpop.f32.mrf.mxu0
    %v617 = vpop.f32.mrf.mxu0
    %v618 = vadd.f32 0.0, %v617
    %v619 = vpop.f32.mrf.mxu0
    %620 = vdwg.mxu0
    %621 = vmatprep.subr.bf16.mxu0 0
    %622 = vmatpush1.bf16.msra.mxu0 %v475
    %623 = vmatprep.subr.bf16.mxu0 0
    %624 = vmatpush1.bf16.msra.mxu0 %v474
    %625 = vmatprep.subr.bf16.mxu0 0
    %626 = vmatpush1.bf16.msra.mxu0 %v473
    %627 = vmatprep.subr.bf16.mxu0 0
    %628 = vmatpush1.bf16.msra.mxu0 %v472
    %629 = vmatprep.subr.bf16.mxu0 0
    %630 = vmatpush1.bf16.msra.mxu0 %v471
    %631 = vmatprep.subr.bf16.mxu0 0
    %632 = vmatpush1.bf16.msra.mxu0 %v470
    %633 = vmatprep.subr.bf16.mxu0 0
    %634 = vmatpush1.bf16.msra.mxu0 %v469
    %635 = vmatprep.subr.bf16.mxu0 0
    %636 = vmatpush1.bf16.msra.mxu0 %v468
    %637 = vmatprep.subr.bf16.mxu0 0
    %638 = vmatpush2.bf16.msra.mxu0 %v483
    %639 = vmatprep.subr.bf16.mxu0 0
    %640 = vmatpush2.bf16.msra.mxu0 %v482
    %641 = vmatprep.subr.bf16.mxu0 0
    %642 = vmatpush2.bf16.msra.mxu0 %v481
    %643 = vmatprep.subr.bf16.mxu0 0
    %644 = vmatpush2.bf16.msra.mxu0 %v480
    %645 = vmatprep.subr.bf16.mxu0 0
    %646 = vmatpush2.bf16.msra.mxu0 %v479
    %647 = vmatprep.subr.bf16.mxu0 0
    %648 = vmatpush2.bf16.msra.mxu0 %v478
    %649 = vmatprep.subr.bf16.mxu0 0
    %650 = vmatpush2.bf16.msra.mxu0 %v477
    %651 = vmatprep.subr.bf16.mxu0 0
    %652 = vmatpush2.bf16.msra.mxu0 %v476
    %653 = vmatprep.mubr.bf16.mxu0 %v63
    %654 = vmatmul.mubr.bf16.gmra.mxu0 %v62
    %v655 = vpop.f32.mrf.mxu0
    %v656 = vadd.f32 %v615, %v655
    %v657 = vpop.f32.mrf.mxu0
    %v658 = vpop.f32.mrf.mxu0
    %v659 = vadd.f32 %v618, %v658
    %v660 = vpop.f32.mrf.mxu0
    %661 = vdwg.mxu0
    %662 = vmatprep.subr.bf16.mxu0 0
    %663 = vmatpush1.bf16.msra.mxu0 %v491
    %664 = vmatprep.subr.bf16.mxu0 0
    %665 = vmatpush1.bf16.msra.mxu0 %v490
    %666 = vmatprep.subr.bf16.mxu0 0
    %667 = vmatpush1.bf16.msra.mxu0 %v489
    %668 = vmatprep.subr.bf16.mxu0 0
    %669 = vmatpush1.bf16.msra.mxu0 %v488
    %670 = vmatprep.subr.bf16.mxu0 0
    %671 = vmatpush1.bf16.msra.mxu0 %v487
    %672 = vmatprep.subr.bf16.mxu0 0
    %673 = vmatpush1.bf16.msra.mxu0 %v486
    %674 = vmatprep.subr.bf16.mxu0 0
    %675 = vmatpush1.bf16.msra.mxu0 %v485
    %676 = vmatprep.subr.bf16.mxu0 0
    %677 = vmatpush1.bf16.msra.mxu0 %v484
    %678 = vmatprep.subr.bf16.mxu0 0
    %679 = vmatpush2.bf16.msra.mxu0 %v499
    %680 = vmatprep.subr.bf16.mxu0 0
    %681 = vmatpush2.bf16.msra.mxu0 %v498
    %682 = vmatprep.subr.bf16.mxu0 0
    %683 = vmatpush2.bf16.msra.mxu0 %v497
    %684 = vmatprep.subr.bf16.mxu0 0
    %685 = vmatpush2.bf16.msra.mxu0 %v496
    %686 = vmatprep.subr.bf16.mxu0 0
    %687 = vmatpush2.bf16.msra.mxu0 %v495
    %688 = vmatprep.subr.bf16.mxu0 0
    %689 = vmatpush2.bf16.msra.mxu0 %v494
    %690 = vmatprep.subr.bf16.mxu0 0
    %691 = vmatpush2.bf16.msra.mxu0 %v493
    %692 = vmatprep.subr.bf16.mxu0 0
    %693 = vmatpush2.bf16.msra.mxu0 %v492
    %694 = vmatprep.mubr.bf16.mxu0 %v65
    %695 = vmatmul.mubr.bf16.gmra.mxu0 %v64
    %v696 = vpop.f32.mrf.mxu0
    %v697 = vadd.f32 %v656, %v696
    %v698 = vpop.f32.mrf.mxu0
    %v699 = vpop.f32.mrf.mxu0
    %v700 = vadd.f32 %v659, %v699
    %v701 = vpop.f32.mrf.mxu0
    %702 = vdwg.mxu0
    %703 = vmatprep.subr.bf16.mxu0 0
    %704 = vmatpush1.bf16.msra.mxu0 %v507
    %705 = vmatprep.subr.bf16.mxu0 0
    %706 = vmatpush1.bf16.msra.mxu0 %v506
    %707 = vmatprep.subr.bf16.mxu0 0
    %708 = vmatpush1.bf16.msra.mxu0 %v505
    %709 = vmatprep.subr.bf16.mxu0 0
    %710 = vmatpush1.bf16.msra.mxu0 %v504
    %711 = vmatprep.subr.bf16.mxu0 0
    %712 = vmatpush1.bf16.msra.mxu0 %v503
    %713 = vmatprep.subr.bf16.mxu0 0
    %714 = vmatpush1.bf16.msra.mxu0 %v502
    %715 = vmatprep.subr.bf16.mxu0 0
    %716 = vmatpush1.bf16.msra.mxu0 %v501
    %717 = vmatprep.subr.bf16.mxu0 0
    %718 = vmatpush1.bf16.msra.mxu0 %v500
    %719 = vmatprep.subr.bf16.mxu0 0
    %720 = vmatpush2.bf16.msra.mxu0 %v515
    %721 = vmatprep.subr.bf16.mxu0 0
    %722 = vmatpush2.bf16.msra.mxu0 %v514
    %723 = vmatprep.subr.bf16.mxu0 0
    %724 = vmatpush2.bf16.msra.mxu0 %v513
    %725 = vmatprep.subr.bf16.mxu0 0
    %726 = vmatpush2.bf16.msra.mxu0 %v512
    %727 = vmatprep.subr.bf16.mxu0 0
    %728 = vmatpush2.bf16.msra.mxu0 %v511
    %729 = vmatprep.subr.bf16.mxu0 0
    %730 = vmatpush2.bf16.msra.mxu0 %v510
    %731 = vmatprep.subr.bf16.mxu0 0
    %732 = vmatpush2.bf16.msra.mxu0 %v509
    %733 = vmatprep.subr.bf16.mxu0 0
    %734 = vmatpush2.bf16.msra.mxu0 %v508
    %735 = vmatprep.mubr.bf16.mxu0 %v67
    %736 = vmatmul.mubr.bf16.gmra.mxu0 %v66
    %v737 = vpop.f32.mrf.mxu0
    %v738 = vadd.f32 %v697, %v737
    %v739 = vpop.f32.mrf.mxu0
    %v740 = vpop.f32.mrf.mxu0
    %v741 = vadd.f32 %v700, %v740
    %v742 = vpop.f32.mrf.mxu0
    %743 = vdwg.mxu0
    %v744 = vadd.f32 %v42, %v738
    %v745 = vadd.f32 %v43, %v741
    %746 = vst [vmem:[#allocation2] sm:$0xff] %v744
    %747 = vst [vmem:[#allocation2 + $0x8] sm:$0xff] %v745
    // Predicated region
    $region22: #{_forward.1} parent=1 // pred_check
      %p748 = pneg %p29
    $region23: #{_forward.1} parent=1 // pred_check_branch
      %750 = sbr.rel (%p748) target = $region25
    $region24: #{_forward.1} parent=1 // pred_region
      %v751 = vld [vmem:[#allocation2] sm:$0xff]
      %v752 = vld [vmem:[#allocation2 + $0x8] sm:$0xff]
      %v753 = vmul.f32 %v751, %v751
      %v754 = vmul.f32 %v752, %v752
      %755 = vadd.xlane.f32.xlu0 %v753
      %v756 = vpop.xlane.xlu0 %755
      %757 = vadd.xlane.f32.xlu0 %v754
      %v758 = vpop.xlane.xlu0 %757
      %v759 = vmax.f32 %v756, 1e-24
      %v760 = vmax.f32 %v758, 1e-24
      %v761 = vrsqrt.pop %v759
      %v762 = vrsqrt.pop %v760
      %v763 = vmul.f32 %v751, %v761
      %v764 = vmul.f32 %v752, %v762
      %765 = vst [vmem:[%s3] sm:$0xff] %v763
      %766 = vst [vmem:[%s3 + $0x8] sm:$0xff] %v764
    $region25: #{_forward.1} parent=1 // pred_fallthru
      _
    // Predicated region
    $region26: #{_forward.1} parent=1 // pred_check
      _
    $region27: #{_forward.1} parent=1 // pred_check_branch
      %768 = sbr.rel (0) target = $region29
    $region28: #{_forward.1} parent=1 // pred_region
      _
    $region29: #{_forward.1} parent=1 // pred_fallthru
      _
    // Predicated region
    $region30: #{_forward.1} parent=1 // pred_check
      _
    $region31: #{_forward.1} parent=1 // pred_check_branch
      %770 = sbr.rel (0) target = $region33
    $region32: #{_forward.1} parent=1 // pred_region
      _
    $region33: #{_forward.1} parent=1 // pred_fallthru
      _
    %771 = vsyncpa [#allocation4], 1

</llo_original>
